<compile_context>
chip_gen: v7x
topology: tpu7x:2x2x1
jax: 0.10.0
libtpu: 0.0.40
codegen_flags: <defaults>
</compile_context>

<pallas_src>
import functools

import jax
import jax.numpy as jnp
from jax import lax
from jax.experimental import pallas as pl
from jax.experimental.pallas import tpu as pltpu

_NEG_BIG = -1e30  # finite "-inf": keeps max()/exp() NaN-free


def _round_up(x, m):
    return (x + m - 1) // m * m


def _vmem_capacity_bytes():
    try:
        info = pltpu.get_tpu_info()
        cap = getattr(info, "vmem_capacity_bytes", None)
        if cap:
            return int(cap)
    except Exception:
        pass
    return 64 << 20  # conservative fallback (v7x per-core ceiling)


def _vmem_need(tb, d_pad, itemsize):
    return (2 * 2 * tb * d_pad * itemsize   # zr + zc tiles, double-buffered
            + 2 * tb * 128 * 4              # output block, double-buffered
            + 3 * tb * 4                    # m / l / pos scratch
            + 3 * tb * tb * 4               # (tb,tb) intermediates / spill room
            + (2 << 20))                    # misc headroom


def _pick_tile(b, d_pad, itemsize, sub, block_b, budget):
    tb = _round_up(min(block_b, _round_up(b, sub)), sub)
    while tb > sub and _vmem_need(tb, d_pad, itemsize) > budget:
        new_tb = max(sub, _round_up(tb // 2, sub))
        if new_tb == tb:
            break
        tb = new_tb
    return tb


def _contrastive_loss_kernel(zr_ref, zc_ref, out_ref, m_sc, l_sc, pos_sc, *,
                             inv_t, pad_cols, matmul_dtype):
    i = pl.program_id(0)            # row block
    k = pl.program_id(1)            # column (reduction) block

    @pl.when(k == 0)
    def _init():
        m_sc[...] = jnp.full_like(m_sc, _NEG_BIG)
        l_sc[...] = jnp.zeros_like(l_sc)
        pos_sc[...] = jnp.zeros_like(pos_sc)

    # (tb, tb) block of sim = z_rows @ z_cols.T, contracting the feature dim of
    # both operands directly (no transpose materialized).  Operands stay in the
    # (bf16) storage dtype -> native MXU rate; accumulate in f32.
    sim = lax.dot_general(
        zr_ref[...].astype(matmul_dtype), zc_ref[...].astype(matmul_dtype),
        dimension_numbers=(((1,), (1,)), ((), ())),
        preferred_element_type=jnp.float32,
    ) * inv_t
    e = jnp.exp(sim) * inv_t                     # logits / T fed to cross_entropy

    # Positive (diagonal) logit, extracted from the same MXU block when k == i
    # (block-local mask only; never a B x B iota).
    @pl.when(k == i)
    def _diag():
        r = lax.broadcasted_iota(jnp.int32, e.shape, 0)
        c = lax.broadcasted_iota(jnp.int32, e.shape, 1)
        pos_sc[...] = jnp.sum(jnp.where(r == c, e, 0.0), axis=-1, keepdims=True)

    # Online (flash-style) logsumexp over column blocks.  Padded columns are
    # NOT masked here; their exact contribution is removed in finalize.
    m_prev = m_sc[...]
    m_new = jnp.maximum(m_prev, jnp.max(e, axis=-1, keepdims=True))
    l_sc[...] = (jnp.exp(m_prev - m_new) * l_sc[...]
                 + jnp.sum(jnp.exp(e - m_new), axis=-1, keepdims=True))
    m_sc[...] = m_new

    @pl.when(k == pl.num_programs(1) - 1)
    def _finalize():
        l = l_sc[...]
        if pad_cols > 0:
            # Padded z rows are exactly zero -> sim == 0 -> logit == inv_t; they
            # only live in the last column block.  Subtract their exact
            # contribution instead of masking every block on the hot path.
            l = l - pad_cols * jnp.exp(inv_t - m_sc[...])
        row_loss = m_sc[...] + jnp.log(l) - pos_sc[...]          # (tb, 1)
        # Lane-dense store (last dim 128) -> unmasked vst.
        out_ref[...] = jnp.broadcast_to(row_loss, out_ref.shape)


def contrastive_loss(h, z, temperature=0.5, block_b=512, use_bf16_matmul=True):
    """Pallas equivalent of ContrastiveLoss(temperature).forward(h, z)."""
    batch = h.shape[0]              # batch_size taken from h, as in the module
    assert z.shape[0] == batch, "kernel assumes z has `batch` rows"
    b, d = z.shape

    compute_dtype = jnp.bfloat16 if use_bf16_matmul else z.dtype
    itemsize = jnp.dtype(compute_dtype).itemsize
    sub = 16 if itemsize == 2 else 8            # sublane granularity
    d_pad = _round_up(d, 128)                   # lane / MXU contraction dim

    # Generation-aware VMEM budget (v5e/v6e: 128 MiB, v7x: 64 MiB per core).
    capacity = _vmem_capacity_bytes()
    budget = (capacity * 3) // 4

    tb = _pick_tile(b, d_pad, itemsize, sub, block_b, budget)
    b_pad = _round_up(b, tb)
    # Give the "parallel" row axis >= 2 blocks when possible so both v7x
    # TensorCores (megacore) get work.
    if b_pad // tb < 2 and b_pad >= 2 * sub:
        tb = _round_up((b_pad + 1) // 2, sub)
        b_pad = _round_up(b, tb)
    pad_cols = b_pad - batch

    # Pad once and store in the compute dtype (bf16 -> half the HBM traffic for
    # the repeated column-tile reads and half the per-tile VMEM footprint).
    z_p = jnp.pad(z, ((0, b_pad - b), (0, d_pad - d))).astype(compute_dtype)

    grid = (b_pad // tb, b_pad // tb)
    need = _vmem_need(tb, d_pad, itemsize)
    vmem_limit = int(min(budget, max(need, 32 << 20)))

    kern = functools.partial(
        _contrastive_loss_kernel,
        inv_t=float(1.0 / temperature), pad_cols=int(pad_cols),
        matmul_dtype=compute_dtype,
    )

    per_row = pl.pallas_call(
        kern,
        out_shape=jax.ShapeDtypeStruct((b_pad, 128), jnp.float32),
        grid_spec=pltpu.PrefetchScalarGridSpec(
            num_scalar_prefetch=0,
            grid=grid,
            in_specs=[
                pl.BlockSpec((tb, d_pad), lambda i, k: (i, 0)),   # row block of z
                pl.BlockSpec((tb, d_pad), lambda i, k: (k, 0)),   # col block of z
            ],
            out_specs=pl.BlockSpec((tb, 128), lambda i, k: (i, 0)),
            scratch_shapes=[pltpu.VMEM((tb, 1), jnp.float32),     # running max
                            pltpu.VMEM((tb, 1), jnp.float32),     # running sum
                            pltpu.VMEM((tb, 1), jnp.float32)],    # positive logit
        ),
        compiler_params=pltpu.CompilerParams(
            dimension_semantics=("parallel", "arbitrary"),
            vmem_limit_bytes=vmem_limit),
    )(z_p, z_p)

    return jnp.mean(per_row[:batch, 0])


def _reference_loss(h, z, temperature=0.5, matmul_dtype=None):
    """Pure-JAX reference (optionally matching the kernel's matmul dtype)."""
    zc = z if matmul_dtype is None else z.astype(matmul_dtype)
    sim = jnp.dot(zc, zc.T, preferred_element_type=jnp.float32) / temperature
    e = jnp.exp(sim) / temperature
    lse = jax.scipy.special.logsumexp(e, axis=-1)
    pos = jnp.diagonal(e)
    return jnp.mean(lse - pos)


if __name__ == "__main__":
    key = jax.random.PRNGKey(0)
    kh, kz = jax.random.split(key)
    B, D = 24, 32
    h = jax.random.normal(kh, (B, D), dtype=jnp.float32)
    z = jax.random.normal(kz, (B, D), dtype=jnp.float32)
    # l2-normalize projections (typical contrastive usage; keeps exp() tame)
    z = z / jnp.linalg.norm(z, axis=-1, keepdims=True)

    # --- bf16-MXU path (default); compare against a matched-precision ref ---
    ref_bf16 = _reference_loss(h, z, 0.5, matmul_dtype=jnp.bfloat16)
    loss_bf16 = jax.block_until_ready(contrastive_loss(h, z, temperature=0.5))
    assert jnp.allclose(loss_bf16, ref_bf16, rtol=1e-3, atol=1e-6), (loss_bf16, ref_bf16)

    # --- f32 path, default tiling (2x2 grid after the megacore split) ---
    ref_f32 = _reference_loss(h, z, 0.5)
    loss_f32 = jax.block_until_ready(
        contrastive_loss(h, z, temperature=0.5, use_bf16_matmul=False))
    assert jnp.allclose(loss_f32, ref_f32, rtol=1e-4, atol=1e-5), (loss_f32, ref_f32)

    # --- f32 path, forced tiny tiles (3x3 grid, no padded columns) ---
    loss_tiled = jax.block_until_ready(
        contrastive_loss(h, z, temperature=0.5, block_b=8, use_bf16_matmul=False))
    assert jnp.allclose(loss_tiled, ref_f32, rtol=1e-4, atol=1e-5), (loss_tiled, ref_f32)

    print("KERNEL_OK")
</pallas_src>

<mosaic_0001>
module attributes {stable_mosaic.version = 11 : i64} {
  func.func @_contrastive_loss_kernel(%arg0: i32, %arg1: i32, %arg2: memref<16x128xbf16, #tpu.memory_space<vmem>>, %arg3: memref<16x128xbf16, #tpu.memory_space<vmem>>, %arg4: memref<16x128xf32, #tpu.memory_space<vmem>>, %arg5: memref<16x1xf32, #tpu.memory_space<vmem>>, %arg6: memref<16x1xf32, #tpu.memory_space<vmem>>, %arg7: memref<16x1xf32, #tpu.memory_space<vmem>>) attributes {dimension_semantics = [#tpu.dimension_semantics<parallel>, #tpu.dimension_semantics<arbitrary>], iteration_bounds = array<i64: 2, 2>, scalar_prefetch = 0 : i64, scratch_operands = 3 : i64, tpu.core_type = #tpu.core_type<tc>, window_params = [{transform_indices = @transform_0, window_bounds = array<i64: 16, 128>}, {transform_indices = @transform_1, window_bounds = array<i64: 16, 128>}, {transform_indices = @transform_2, window_bounds = array<i64: 16, 128>}]} {
    %c0_i32 = arith.constant 0 : i32
    %0 = arith.cmpi eq, %arg1, %c0_i32 : i32
    %1 = arith.extui %0 : i1 to i32
    %c0_i32_0 = arith.constant 0 : i32
    %2 = arith.cmpi ne, %1, %c0_i32_0 : i32
    scf.if %2 {
      %cst_18 = arith.constant -1.000000e+30 : f32
      %33 = vector.broadcast %cst_18 : f32 to vector<16x1xf32>
      %c0_19 = arith.constant 0 : index
      %c0_20 = arith.constant 0 : index
      %34 = vector.load %arg5[%c0_19, %c0_20] : memref<16x1xf32, #tpu.memory_space<vmem>>, vector<16x1xf32>
      tpu.vector_store %arg5[%c0_19, %c0_20], %33 {strides = array<i32>} : memref<16x1xf32, #tpu.memory_space<vmem>>, vector<16x1xf32>,
      %cst_21 = arith.constant 0.000000e+00 : f32
      %35 = vector.broadcast %cst_21 : f32 to vector<16x1xf32>
      %c0_22 = arith.constant 0 : index
      %c0_23 = arith.constant 0 : index
      %36 = vector.load %arg6[%c0_22, %c0_23] : memref<16x1xf32, #tpu.memory_space<vmem>>, vector<16x1xf32>
      tpu.vector_store %arg6[%c0_22, %c0_23], %35 {strides = array<i32>} : memref<16x1xf32, #tpu.memory_space<vmem>>, vector<16x1xf32>,
      %cst_24 = arith.constant 0.000000e+00 : f32
      %37 = vector.broadcast %cst_24 : f32 to vector<16x1xf32>
      %c0_25 = arith.constant 0 : index
      %c0_26 = arith.constant 0 : index
      %38 = vector.load %arg7[%c0_25, %c0_26] : memref<16x1xf32, #tpu.memory_space<vmem>>, vector<16x1xf32>
      tpu.vector_store %arg7[%c0_25, %c0_26], %37 {strides = array<i32>} : memref<16x1xf32, #tpu.memory_space<vmem>>, vector<16x1xf32>,
    } else {
    }
    %c0 = arith.constant 0 : index
    %c0_1 = arith.constant 0 : index
    %3 = vector.load %arg2[%c0, %c0_1] : memref<16x128xbf16, #tpu.memory_space<vmem>>, vector<16x128xbf16>
    %c0_2 = arith.constant 0 : index
    %c0_3 = arith.constant 0 : index
    %4 = vector.load %arg3[%c0_2, %c0_3] : memref<16x128xbf16, #tpu.memory_space<vmem>>, vector<16x128xbf16>
    %cst = arith.constant dense<0.000000e+00> : vector<16x16xf32>
    %5 = tpu.matmul %3, %4, %cst {dimension_numbers = #tpu.dot_dimension_numbers<[1], [1], [0], [0], [0, 0, 1, 0], [], []>} : vector<16x128xbf16>, vector<16x128xbf16>, vector<16x16xf32> -> vector<16x16xf32>
    %cst_4 = arith.constant 2.000000e+00 : f32
    %6 = vector.broadcast %cst_4 : f32 to vector<16x16xf32>
    %7 = arith.mulf %5, %6 : vector<16x16xf32>
    %8 = math.exp %7 : vector<16x16xf32>
    %cst_5 = arith.constant 2.000000e+00 : f32
    %9 = vector.broadcast %cst_5 : f32 to vector<16x16xf32>
    %10 = arith.mulf %8, %9 : vector<16x16xf32>
    %11 = arith.cmpi eq, %arg1, %arg0 : i32
    %12 = arith.extui %11 : i1 to i32
    %c0_i32_6 = arith.constant 0 : i32
    %13 = arith.cmpi ne, %12, %c0_i32_6 : i32
    scf.if %13 {
      %33 = tpu.iota {dimensions = array<i32: 0>} : vector<16x16xi32>
      %34 = tpu.iota {dimensions = array<i32: 1>} : vector<16x16xi32>
      %35 = arith.cmpi eq, %33, %34 : vector<16x16xi32>
      %cst_18 = arith.constant 0.000000e+00 : f32
      %36 = vector.broadcast %cst_18 : f32 to vector<16x16xf32>
      %37 = arith.select %35, %10, %36 : vector<16x16xi1>, vector<16x16xf32>
      %cst_19 = arith.constant dense<0.000000e+00> : vector<16xf32>
      %38 = vector.multi_reduction <add>, %37, %cst_19 [1] : vector<16x16xf32> to vector<16xf32>
      %39 = vector.shape_cast %38 : vector<16xf32> to vector<16x1xf32>
      %c0_20 = arith.constant 0 : index
      %c0_21 = arith.constant 0 : index
      %40 = vector.load %arg7[%c0_20, %c0_21] : memref<16x1xf32, #tpu.memory_space<vmem>>, vector<16x1xf32>
      tpu.vector_store %arg7[%c0_20, %c0_21], %39 {strides = array<i32>} : memref<16x1xf32, #tpu.memory_space<vmem>>, vector<16x1xf32>,
    } else {
    }
    %c0_7 = arith.constant 0 : index
    %c0_8 = arith.constant 0 : index
    %14 = vector.load %arg5[%c0_7, %c0_8] : memref<16x1xf32, #tpu.memory_space<vmem>>, vector<16x1xf32>
    %cst_9 = arith.constant dense<0xFF800000> : vector<16xf32>
    %15 = vector.multi_reduction <maximumf>, %10, %cst_9 [1] : vector<16x16xf32> to vector<16xf32>
    %16 = vector.shape_cast %15 : vector<16xf32> to vector<16x1xf32>
    %17 = arith.maximumf %14, %16 : vector<16x1xf32>
    %18 = arith.subf %14, %17 : vector<16x1xf32>
    %19 = math.exp %18 : vector<16x1xf32>
    %c0_10 = arith.constant 0 : index
    %c0_11 = arith.constant 0 : index
    %20 = vector.load %arg6[%c0_10, %c0_11] : memref<16x1xf32, #tpu.memory_space<vmem>>, vector<16x1xf32>
    %21 = arith.mulf %19, %20 : vector<16x1xf32>
    %22 = vector.broadcast %17 : vector<16x1xf32> to vector<16x16xf32>
    %23 = arith.subf %10, %22 : vector<16x16xf32>
    %24 = math.exp %23 : vector<16x16xf32>
    %cst_12 = arith.constant dense<0.000000e+00> : vector<16xf32>
    %25 = vector.multi_reduction <add>, %24, %cst_12 [1] : vector<16x16xf32> to vector<16xf32>
    %26 = vector.shape_cast %25 : vector<16xf32> to vector<16x1xf32>
    %27 = arith.addf %21, %26 : vector<16x1xf32>
    %c0_13 = arith.constant 0 : index
    %c0_14 = arith.constant 0 : index
    %28 = vector.load %arg6[%c0_13, %c0_14] : memref<16x1xf32, #tpu.memory_space<vmem>>, vector<16x1xf32>
    tpu.vector_store %arg6[%c0_13, %c0_14], %27 {strides = array<i32>} : memref<16x1xf32, #tpu.memory_space<vmem>>, vector<16x1xf32>,
    %c0_15 = arith.constant 0 : index
    %c0_16 = arith.constant 0 : index
    %29 = vector.load %arg5[%c0_15, %c0_16] : memref<16x1xf32, #tpu.memory_space<vmem>>, vector<16x1xf32>
    tpu.vector_store %arg5[%c0_15, %c0_16], %17 {strides = array<i32>} : memref<16x1xf32, #tpu.memory_space<vmem>>, vector<16x1xf32>,
    %c1_i32 = arith.constant 1 : i32
    %30 = arith.cmpi eq, %arg1, %c1_i32 : i32
    %31 = arith.extui %30 : i1 to i32
    %c0_i32_17 = arith.constant 0 : i32
    %32 = arith.cmpi ne, %31, %c0_i32_17 : i32
    scf.if %32 {
      %c0_18 = arith.constant 0 : index
      %c0_19 = arith.constant 0 : index
      %33 = vector.load %arg6[%c0_18, %c0_19] : memref<16x1xf32, #tpu.memory_space<vmem>>, vector<16x1xf32>
      %c0_20 = arith.constant 0 : index
      %c0_21 = arith.constant 0 : index
      %34 = vector.load %arg5[%c0_20, %c0_21] : memref<16x1xf32, #tpu.memory_space<vmem>>, vector<16x1xf32>
      %cst_22 = arith.constant 2.000000e+00 : f32
      %35 = vector.broadcast %cst_22 : f32 to vector<16x1xf32>
      %36 = arith.subf %35, %34 : vector<16x1xf32>
      %37 = math.exp %36 : vector<16x1xf32>
      %cst_23 = arith.constant 8.000000e+00 : f32
      %38 = vector.broadcast %cst_23 : f32 to vector<16x1xf32>
      %39 = arith.mulf %38, %37 : vector<16x1xf32>
      %40 = arith.subf %33, %39 : vector<16x1xf32>
      %c0_24 = arith.constant 0 : index
      %c0_25 = arith.constant 0 : index
      %41 = vector.load %arg5[%c0_24, %c0_25] : memref<16x1xf32, #tpu.memory_space<vmem>>, vector<16x1xf32>
      %42 = math.log %40 : vector<16x1xf32>
      %43 = arith.addf %41, %42 : vector<16x1xf32>
      %c0_26 = arith.constant 0 : index
      %c0_27 = arith.constant 0 : index
      %44 = vector.load %arg7[%c0_26, %c0_27] : memref<16x1xf32, #tpu.memory_space<vmem>>, vector<16x1xf32>
      %45 = arith.subf %43, %44 : vector<16x1xf32>
      %46 = vector.shape_cast %45 : vector<16x1xf32> to vector<16x1xf32>
      %47 = vector.broadcast %46 : vector<16x1xf32> to vector<16x128xf32>
      %c0_28 = arith.constant 0 : index
      %c0_29 = arith.constant 0 : index
      %48 = vector.load %arg4[%c0_28, %c0_29] : memref<16x128xf32, #tpu.memory_space<vmem>>, vector<16x128xf32>
      tpu.vector_store %arg4[%c0_28, %c0_29], %47 {strides = array<i32>} : memref<16x128xf32, #tpu.memory_space<vmem>>, vector<16x128xf32>,
    } else {
    }
    return
  }
  func.func @transform_0(%arg0: i32, %arg1: i32) -> (i32, i32) {
    %c0_i32 = arith.constant 0 : i32
    %c0_i32_0 = arith.constant 0 : i32
    return %arg0, %c0_i32 : i32, i32
  }
  func.func @transform_1(%arg0: i32, %arg1: i32) -> (i32, i32) {
    %c0_i32 = arith.constant 0 : i32
    %c0_i32_0 = arith.constant 0 : i32
    return %arg1, %c0_i32 : i32, i32
  }
  func.func @transform_2(%arg0: i32, %arg1: i32) -> (i32, i32) {
    %c0_i32 = arith.constant 0 : i32
    %c0_i32_0 = arith.constant 0 : i32
    return %arg0, %c0_i32 : i32, i32
  }
}

</mosaic_0001>

<llo_original>
// kernel: tpu_custom_call.1
$region0: #{tpu_custom_call.1}
  #allocation0 [shape = 'u32[]', space=smem, size = 0x4, offset = 0x4, fixed_abs, tag = 'smem constant byte address 0x4 - core index']
  #allocation1 [shape = 'u32[144,128]{1,0:T(1,128)}', space=vmem, size = 0x12000, scoped, tag = 'internal scratch']
  #allocation2 [shape = 'f32[16,1]{1,0:T(8,128)}', space=vmem, size = 0x2000, scoped, tag = 'scratch operand']
  #allocation3 [shape = 'f32[16,1]{1,0:T(8,128)}', space=vmem, size = 0x2000, scoped, tag = 'scratch operand']
  #allocation4 [shape = 'f32[16,1]{1,0:T(8,128)}', space=vmem, size = 0x2000, scoped, tag = 'scratch operand']
  %s0 = inlined_call_operand.hbm [shape: bf16[32,128], index: 0, kind: input, shape index: {}]
  %s1 = inlined_call_operand.hbm [shape: bf16[32,128], index: 1, kind: input, shape index: {}]
  %s2 = inlined_call_operand.hbm [shape: f32[32,128], index: 2, kind: output, shape index: {}]
  %s3 = sld [smem:[#allocation0]]
  $region61: #{tpu_custom_call.1} parent=0
    _
  %s5 = ssub.s32 1, %s3
  %s6 = scalar_select 0, %s5, %s3
  $region1: #{tpu_custom_call.1} parent=0
    #allocation5 [shape = 'u8[8192]{0}', space=vmem, size = 0x2000, scoped, tag = 'input window, operand 0']
    #allocation6 [shape = 's32[2]{0}', space=sflag, size = 0x8, scoped, tag = 'scoped memory for tpu_custom_call.1']
    #allocation7 [shape = 's32[2]{0}', space=sflag, size = 0x8, scoped, tag = 'scoped memory for tpu_custom_call.1']
    #allocation8 [shape = 'u8[8192]{0}', space=vmem, size = 0x2000, scoped, tag = 'input window, operand 1']
    #allocation9 [shape = 's32[2]{0}', space=sflag, size = 0x8, scoped, tag = 'scoped memory for tpu_custom_call.1']
    #allocation10 [shape = 'u8[16384]{0}', space=vmem, size = 0x4000, scoped, tag = 'output window, operand 0']
    %7 = vsyncpa [#allocation6], 0
    %s8 = scalar_lea.sflag [#allocation6], 1
    %9 = vsyncpa %s8, 0
    %10 = vsyncpa [#allocation9], 0
    %s11 = scalar_lea.sflag [#allocation9], 1
    %12 = vsyncpa %s11, 0
    %13 = vsyncpa [#allocation7], 0
    %s14 = scalar_lea.sflag [#allocation7], 1
    %15 = vsyncpa %s14, 0
    loop: start=0, step=1, limit=6
    $region2: #{tpu_custom_call.1} parent=1 // loop_pre_header
      _
    $region3: #{tpu_custom_call.1} parent=1 // loop_header
      %s17 = sphi 0, %s21
      %p18 = scmp.ge.s32.totalorder %s17, 6
      %s24 = sphi 0, %s36
      %s25 = sphi 0, %s32
      %s26 = sphi 0, %s24
      %s27 = sphi 0, %s25
      %s28 = sphi 0, %s26
      %s29 = sphi 0, %s27
      %s39 = sphi 0, %s41
      %s42 = sphi 0, %s39
      %s43 = sphi 0, %s42
      %s59 = sphi 0, %s43
      %s65 = sphi 0, %s67
      %s68 = sphi 0, %s65
      %s69 = sphi 0, %s68
      %s85 = sphi 0, %s69
      %s91 = sphi 0, %s93
      %s94 = sphi 0, %s91
      %s95 = sphi 0, %s94
      %s111 = sphi 0, %s95
    $region4: #{tpu_custom_call.1} parent=1 // loop_header_branch
      %20 = sbr.rel (%p18) target = $region8
    $region5: #{tpu_custom_call.1} parent=1 // loop_body
      %s22 = ssub.s32 %s17, 1
      %s23 = ssub.s32 %s17, 2
      %s30 = sadd.s32 1, %s25
      %p31 = scmp.ge.s32.totalorder %s30, 2
      %s32 = scalar_select %p31, 0, %s30
      %s33 = sadd.s32 1, %s24
      %s34 = scalar_select %p31, %s33, %s24
      %p35 = scmp.ge.s32.totalorder %s34, 2
      %s36 = scalar_select %p35, 0, %s34
      %s37 = ssub.s32 %s24, %s36
      %p38 = scmp.eq.s32.totalorder %s37, 0
      %s40 = sadd.s32 %s39, 1
      %s41 = scalar_select %p38, %s39, %s40
      %p44 = pneg %p38
      %p45 = scmp.eq.s32.totalorder %s17, 3
      %p46 = por %p44, %p45
      %p47 = scmp.ne.s32.totalorder %s39, %s42
      %p48 = scmp.eq.s32.totalorder %s17, 0
      %p49 = por %p47, %p48
      %p50 = scmp.ne.s32.totalorder %s39, %s42
      %p51 = scmp.eq.s32.totalorder %s22, 3
      %p52 = por %p50, %p51
      %p53 = scmp.ne.s32.totalorder %s42, %s43
      %p54 = scmp.eq.s32.totalorder %s22, 0
      %p55 = por %p53, %p54
      %p56 = scmp.ne.s32.totalorder %s42, %s43
      %p57 = scmp.eq.s32.totalorder %s23, 3
      %p58 = por %p56, %p57
      %p60 = scmp.ne.s32.totalorder %s43, %s59
      %p61 = scmp.eq.s32.totalorder %s23, 0
      %p62 = por %p60, %p61
      %s63 = ssub.s32 %s25, %s32
      %p64 = scmp.eq.s32.totalorder %s63, 0
      %s66 = sadd.s32 %s65, 1
      %s67 = scalar_select %p64, %s65, %s66
      %p70 = pneg %p64
      %p71 = scmp.eq.s32.totalorder %s17, 3
      %p72 = por %p70, %p71
      %p73 = scmp.ne.s32.totalorder %s65, %s68
      %p74 = scmp.eq.s32.totalorder %s17, 0
      %p75 = por %p73, %p74
      %p76 = scmp.ne.s32.totalorder %s65, %s68
      %p77 = scmp.eq.s32.totalorder %s22, 3
      %p78 = por %p76, %p77
      %p79 = scmp.ne.s32.totalorder %s68, %s69
      %p80 = scmp.eq.s32.totalorder %s22, 0
      %p81 = por %p79, %p80
      %p82 = scmp.ne.s32.totalorder %s68, %s69
      %p83 = scmp.eq.s32.totalorder %s23, 3
      %p84 = por %p82, %p83
      %p86 = scmp.ne.s32.totalorder %s69, %s85
      %p87 = scmp.eq.s32.totalorder %s23, 0
      %p88 = por %p86, %p87
      %s89 = ssub.s32 %s24, %s36
      %p90 = scmp.eq.s32.totalorder %s89, 0
      %s92 = sadd.s32 %s91, 1
      %s93 = scalar_select %p90, %s91, %s92
      %p96 = pneg %p90
      %p97 = scmp.eq.s32.totalorder %s17, 3
      %p98 = por %p96, %p97
      %p99 = scmp.ne.s32.totalorder %s91, %s94
      %p100 = scmp.eq.s32.totalorder %s17, 0
      %p101 = por %p99, %p100
      %p102 = scmp.ne.s32.totalorder %s91, %s94
      %p103 = scmp.eq.s32.totalorder %s22, 3
      %p104 = por %p102, %p103
      %p105 = scmp.ne.s32.totalorder %s94, %s95
      %p106 = scmp.eq.s32.totalorder %s22, 0
      %p107 = por %p105, %p106
      %p108 = scmp.ne.s32.totalorder %s94, %s95
      %p109 = scmp.eq.s32.totalorder %s23, 3
      %p110 = por %p108, %p109
      %p112 = scmp.ne.s32.totalorder %s95, %s111
      %p113 = scmp.eq.s32.totalorder %s23, 0
      %p114 = por %p112, %p113
      %p115 = scmp.le.s32.totalorder 1, %s17
      %p116 = scmp.lt.s32.totalorder %s17, 5
      %p117 = pnand %p115, %p116
      %p118 = pneg %p117
      // Predicated region
      $region9: #{tpu_custom_call.1} parent=5 // pred_check
        _
      $region10: #{tpu_custom_call.1} parent=5 // pred_check_branch
        %120 = sbr.rel (%p117) target = $region12
      $region11: #{tpu_custom_call.1} parent=5 // pred_region
        %s121 = ssub.s32 %s17, 1
      $region12: #{tpu_custom_call.1} parent=5 // pred_fallthru
        _
      %p122 = scmp.lt.s32.totalorder %s17, 4
      // Predicated region
      $region13: #{tpu_custom_call.1} parent=5 // pred_check
        %p123 = pneg %p122
      $region14: #{tpu_custom_call.1} parent=5 // pred_check_branch
        %125 = sbr.rel (%p123) target = $region16
      $region15: #{tpu_custom_call.1} parent=5 // pred_region
        // Predicated region
        $region17: #{tpu_custom_call.1} parent=15 // pred_check
          %p126 = pneg %p49
        $region18: #{tpu_custom_call.1} parent=15 // pred_check_branch
          %128 = sbr.rel (%p126) target = $region20
        $region19: #{tpu_custom_call.1} parent=15 // pred_region
          %s129 = sand.u32 %s39, 1
          %s130 = scalar_lea.sflag [#allocation6], %s129
          %s131 = sand.u32 %s39, 1
          %s132 = smul.addr %s131, 8
          %s133 = scalar_lea.vmem [#allocation5], %s132
          %s134 = smul.u32 2, %s24
          %s136 = ssub.s32 128, 128
          %137 = vsyncadd %s130, %s136
          %s138 = smul.addr %s134, 64
          %s139 = scalar_lea.hbm %s0, %s138
          %s140 = sshll.u32 %s133, 4
          %s141 = int_to_ptr.vmem [resolvable:$true] %s140
          %146 = dma.hbm_to_vmem [thread:$0]  %s139, 128, %s141, %s130, 64, 64, 4
        $region20: #{tpu_custom_call.1} parent=15 // pred_fallthru
          _
        // Predicated region
        $region21: #{tpu_custom_call.1} parent=15 // pred_check
          %p147 = pneg %p75
        $region22: #{tpu_custom_call.1} parent=15 // pred_check_branch
          %149 = sbr.rel (%p147) target = $region24
        $region23: #{tpu_custom_call.1} parent=15 // pred_region
          %s150 = sand.u32 %s65, 1
          %s151 = scalar_lea.sflag [#allocation9], %s150
          %s152 = sand.u32 %s65, 1
          %s153 = smul.addr %s152, 8
          %s154 = scalar_lea.vmem [#allocation8], %s153
          %s155 = smul.u32 2, %s25
          %s157 = ssub.s32 128, 128
          %158 = vsyncadd %s151, %s157
          %s159 = smul.addr %s155, 64
          %s160 = scalar_lea.hbm %s1, %s159
          %s161 = sshll.u32 %s154, 4
          %s162 = int_to_ptr.vmem [resolvable:$true] %s161
          %167 = dma.hbm_to_vmem [thread:$0]  %s160, 128, %s162, %s151, 64, 64, 4
        $region24: #{tpu_custom_call.1} parent=15 // pred_fallthru
          _
      $region16: #{tpu_custom_call.1} parent=5 // pred_fallthru
        _
      %p168 = scmp.le.s32.totalorder 1, %s17
      %p169 = scmp.lt.s32.totalorder %s17, 5
      %p170 = pnand %p168, %p169
      %p171 = pneg %p170
      // Predicated region
      $region25: #{tpu_custom_call.1} parent=5 // pred_check
        _
      $region26: #{tpu_custom_call.1} parent=5 // pred_check_branch
        %173 = sbr.rel (%p170) target = $region28
      $region27: #{tpu_custom_call.1} parent=5 // pred_region
        %s174 = ssub.s32 %s17, 1
        %s175 = sand.u32 %s42, 1
        %s176 = scalar_lea.sflag [#allocation6], %s175
        %s177 = sand.u32 %s42, 1
        %s178 = smul.addr %s177, 8
        %s179 = scalar_lea.vmem [#allocation5], %s178
        // Predicated region
        $region29: #{tpu_custom_call.1} parent=27 // pred_check
          %p180 = pneg %p55
        $region30: #{tpu_custom_call.1} parent=27 // pred_check_branch
          %182 = sbr.rel (%p180) target = $region32
        $region31: #{tpu_custom_call.1} parent=27 // pred_region
          %183 = dma.done %s176, 128
        $region32: #{tpu_custom_call.1} parent=27 // pred_fallthru
          _
        %s184 = sand.u32 %s68, 1
        %s185 = scalar_lea.sflag [#allocation9], %s184
        %s186 = sand.u32 %s68, 1
        %s187 = smul.addr %s186, 8
        %s188 = scalar_lea.vmem [#allocation8], %s187
        // Predicated region
        $region33: #{tpu_custom_call.1} parent=27 // pred_check
          %p189 = pneg %p81
        $region34: #{tpu_custom_call.1} parent=27 // pred_check_branch
          %191 = sbr.rel (%p189) target = $region36
        $region35: #{tpu_custom_call.1} parent=27 // pred_region
          %192 = dma.done %s185, 128
        $region36: #{tpu_custom_call.1} parent=27 // pred_fallthru
          _
        %s193 = sand.u32 %s42, 1
        %s194 = scalar_lea.sflag [#allocation6], %s193
        %s195 = sand.u32 %s42, 1
        %s196 = smul.addr %s195, 8
        %s197 = scalar_lea.vmem [#allocation5], %s196
        %p198 = pneg %p55
        %p199 = pneg %p52
        %s200 = sand.u32 %s68, 1
        %s201 = scalar_lea.sflag [#allocation9], %s200
        %s202 = sand.u32 %s68, 1
        %s203 = smul.addr %s202, 8
        %s204 = scalar_lea.vmem [#allocation8], %s203
        %p205 = pneg %p81
        %p206 = pneg %p78
        %p207 = pneg %p107
        %p208 = pneg %p104
        %s209 = sand.u32 %s94, 1
        %s210 = scalar_lea.sflag [#allocation7], %s209
        %s211 = sand.u32 %s94, 1
        %s212 = smul.addr %s211, 16
        %s213 = scalar_lea.vmem [#allocation10], %s212
        %s214 = smul.u32 2, %s26
        %s215 = smul.u32 2, %s27
        %s216 = smul.u32 2, %s26
        %p218 = scmp.eq.s32.totalorder %s27, 0
        // Predicated region
        $region37: #{tpu_custom_call.1} parent=27 // pred_check
          %p219 = pneg %p218
        $region38: #{tpu_custom_call.1} parent=27 // pred_check_branch
          %221 = sbr.rel (%p219) target = $region40
        $region39: #{tpu_custom_call.1} parent=27 // pred_region
          %vm222 = vcmask 7168
          %223 = vst.msk [vmem:[#allocation2] sm:$0xff] %vm222, -1e+30
          %224 = vst.msk [vmem:[#allocation2 + $0x8] sm:$0xff] %vm222, -1e+30
          %225 = vst.msk [vmem:[#allocation3] sm:$0xff] %vm222, 0.0
          %226 = vst.msk [vmem:[#allocation3 + $0x8] sm:$0xff] %vm222, 0.0
          %227 = vst.msk [vmem:[#allocation4] sm:$0xff] %vm222, 0.0
          %228 = vst.msk [vmem:[#allocation4 + $0x8] sm:$0xff] %vm222, 0.0
        $region40: #{tpu_custom_call.1} parent=27 // pred_fallthru
          _
        %v229 = vld [vmem:[%s179] sm:$0xf]
        %v230 = vld [vmem:[%s179 + $0x4] sm:$0xf]
        %v231 = vld [vmem:[%s188] sm:$0xf]
        %v232 = vld [vmem:[%s188 + $0x4] sm:$0xf]
        %v235 = vunpack.c.l.b16 %v229
        %v236 = vunpack.c.l.b16 %v230
        %v237 = vpack.c.b16 %v236, %v235
        %v241 = vunpack.c.l.b16 %v231
        %v242 = vunpack.c.l.b16 %v232
        %v243 = vpack.c.b16 %v242, %v241
        %245 = vmatprep.subr.bf16.mxu0 0
        %246 = vmatpush1.bf16.xpose.msra.mxu0 %v243
        %247 = vmatprep.subr.bf16.mxu0 0
        %248 = vmatpush1.bf16.xpose.msra.mxu0 0
        %249 = vmatprep.subr.bf16.mxu0 0
        %250 = vmatpush1.bf16.xpose.msra.mxu0 0
        %251 = vmatprep.subr.bf16.mxu0 0
        %252 = vmatpush1.bf16.xpose.msra.mxu0 0
        %253 = vmatprep.subr.bf16.mxu0 0
        %254 = vmatpush1.bf16.xpose.msra.mxu0 0
        %255 = vmatprep.subr.bf16.mxu0 0
        %256 = vmatpush1.bf16.xpose.msra.mxu0 0
        %257 = vmatprep.subr.bf16.mxu0 0
        %258 = vmatpush1.bf16.xpose.msra.mxu0 0
        %259 = vmatprep.subr.bf16.mxu0 0
        %260 = vmatpush1.bf16.xpose.msra.mxu0 0
        %261 = vmatprep.subr.bf16.mxu0 0
        %262 = vmatpush1.bf16.xpose.msra.mxu0 0
        %263 = vmatprep.subr.bf16.mxu0 0
        %264 = vmatpush1.bf16.xpose.msra.mxu0 0
        %265 = vmatprep.subr.bf16.mxu0 0
        %266 = vmatpush1.bf16.xpose.msra.mxu0 0
        %267 = vmatprep.subr.bf16.mxu0 0
        %268 = vmatpush1.bf16.xpose.msra.mxu0 0
        %269 = vmatprep.subr.bf16.mxu0 0
        %270 = vmatpush1.bf16.xpose.msra.mxu0 0
        %271 = vmatprep.subr.bf16.mxu0 0
        %272 = vmatpush1.bf16.xpose.msra.mxu0 0
        %273 = vmatprep.subr.bf16.mxu0 0
        %274 = vmatpush1.bf16.xpose.msra.mxu0 0
        %275 = vmatprep.subr.bf16.mxu0 0
        %276 = vmatpush1.bf16.xpose.msra.mxu0 0
        %277 = vmatprep.mubr.bf16.mxu0 0
        %278 = vmatmul.mubr.bf16.gmra.mrb[0].mxu0 %v237
        %v279 = vpop.f32.mrb[0].mxu0
        %v280 = vadd.f32 0.0, %v279
        %v281 = vpop.f32.mrb[0].mxu0
        %v282 = vpop.f32.mrb[0].mxu0
        %v283 = vadd.f32 0.0, %v282
        %v284 = vpop.f32.mrb[0].mxu0
        %285 = vdwg.mxu0
        %v286 = vmul.f32 %v280, 2.0
        %v287 = vmul.f32 %v283, 2.0
        %v288 = vmul.f32 %v286, 1.442695
        %v289 = vpow.pop %v288
        %v290 = vmul.f32 %v287, 1.442695
        %v291 = vpow.pop %v290
        %v292 = vmul.f32 %v289, 2.0
        %v293 = vmul.f32 %v291, 2.0
        %p294 = scmp.eq.s32.totalorder %s27, %s26
        // Predicated region
        $region41: #{tpu_custom_call.1} parent=27 // pred_check
          %p295 = pneg %p294
        $region42: #{tpu_custom_call.1} parent=27 // pred_check_branch
          %297 = sbr.rel (%p295) target = $region44
        $region43: #{tpu_custom_call.1} parent=27 // pred_region
          %v298 = vlaneseq
          %v299 = vshrl.u32 %v298, 7
          %v300 = vadd.s32 %v299, 8
          %v301 = vlaneseq
          %v302 = vand.u32 %v301, 127
          %vm303 = vcmp.eq.s32.totalorder %v299, %v302
          %vm304 = vcmp.eq.s32.totalorder %v300, %v302
          %v305 = vsel %vm303, %v292, 0.0
          %v306 = vsel %vm304, %v293, 0.0
          %vm307 = vcmask 130048
          %v308 = vsel %vm307, %v305, 0.0
          %309 = vadd.xlane.f32.xlu0 %v308
          %v310 = vpop.xlane.xlu0 %309
          %v311 = vsel %vm307, %v306, 0.0
          %312 = vadd.xlane.f32.xlu0 %v311
          %v313 = vpop.xlane.xlu0 %312
          %vm314 = vcmask 7168
          %315 = vst.msk [vmem:[#allocation4] sm:$0xff] %vm314, %v310
          %316 = vst.msk [vmem:[#allocation4 + $0x8] sm:$0xff] %vm314, %v313
        $region44: #{tpu_custom_call.1} parent=27 // pred_fallthru
          _
        %v317 = vld [vmem:[#allocation2] sm:$0xff]
        %v318 = vld [vmem:[#allocation2 + $0x8] sm:$0xff]
        %vm319 = vcmask 130048
        %v320 = vsel %vm319, %v292, -inf
        %321 = vmax.xlane.f32.xlu0 %v320
        %v322 = vpop.xlane.xlu0 %321
        %v323 = vsel %vm319, %v293, -inf
        %324 = vmax.xlane.f32.xlu0 %v323
        %v325 = vpop.xlane.xlu0 %324
        %v326 = vmax.f32 %v317, %v322
        %v327 = vmax.f32 %v318, %v325
        %v328 = vsub.f32 %v317, %v326
        %v329 = vsub.f32 %v318, %v327
        %v330 = vmul.f32 %v328, 1.442695
        %v331 = vpow.pop %v330
        %v332 = vmul.f32 %v329, 1.442695
        %v333 = vpow.pop %v332
        %v334 = vld [vmem:[#allocation3] sm:$0xff]
        %v335 = vld [vmem:[#allocation3 + $0x8] sm:$0xff]
        %v336 = vmul.f32 %v331, %v334
        %v337 = vmul.f32 %v333, %v335
        %339 = vset.pattern.permute.xlu0 0
        %340 = vperm.xlu0 %339, %v326
        %v341 = vpop.permute.xlu0 %340
        %344 = vset.pattern.permute.xlu0 0
        %345 = vperm.xlu0 %344, %v327
        %v346 = vpop.permute.xlu0 %345
        %v348 = vsub.f32 %v292, %v341
        %v349 = vsub.f32 %v293, %v346
        %v350 = vmul.f32 %v348, 1.442695
        %v351 = vpow.pop %v350
        %v352 = vmul.f32 %v349, 1.442695
        %v353 = vpow.pop %v352
        %v354 = vsel %vm319, %v351, 0.0
        %355 = vadd.xlane.f32.xlu0 %v354
        %v356 = vpop.xlane.xlu0 %355
        %v357 = vsel %vm319, %v353, 0.0
        %358 = vadd.xlane.f32.xlu0 %v357
        %v359 = vpop.xlane.xlu0 %358
        %v360 = vadd.f32 %v336, %v356
        %v361 = vadd.f32 %v337, %v359
        %vm362 = vcmask 7168
        %363 = vst.msk [vmem:[#allocation3] sm:$0xff] %vm362, %v360
        %364 = vst.msk [vmem:[#allocation3 + $0x8] sm:$0xff] %vm362, %v361
        %365 = vst.msk [vmem:[#allocation2] sm:$0xff] %vm362, %v326
        %366 = vst.msk [vmem:[#allocation2 + $0x8] sm:$0xff] %vm362, %v327
        %p367 = scmp.eq.s32.totalorder %s27, 1
        // Predicated region
        $region45: #{tpu_custom_call.1} parent=27 // pred_check
          %p368 = pneg %p367
        $region46: #{tpu_custom_call.1} parent=27 // pred_check_branch
          %370 = sbr.rel (%p368) target = $region48
        $region47: #{tpu_custom_call.1} parent=27 // pred_region
          %v371 = vld [vmem:[#allocation3] sm:$0xff]
          %v372 = vld [vmem:[#allocation3 + $0x8] sm:$0xff]
          %v373 = vld [vmem:[#allocation2] sm:$0xff]
          %v374 = vld [vmem:[#allocation2 + $0x8] sm:$0xff]
          %v375 = vsub.f32 2.0, %v373
          %v376 = vsub.f32 2.0, %v374
          %v377 = vmul.f32 %v375, 1.442695
          %v378 = vpow.pop %v377
          %v379 = vmul.f32 %v376, 1.442695
          %v380 = vpow.pop %v379
          %v381 = vmul.f32 %v378, 8.0
          %v382 = vmul.f32 %v380, 8.0
          %v383 = vsub.f32 %v371, %v381
          %v384 = vsub.f32 %v372, %v382
          %v385 = vlog2.pop %v383
          %v386 = vmul.f32 %v385, 0.6931472
          %v387 = vlog2.pop %v384
          %v388 = vmul.f32 %v387, 0.6931472
          %v389 = vadd.f32 %v373, %v386
          %v390 = vadd.f32 %v374, %v388
          %v391 = vld [vmem:[#allocation4] sm:$0xff]
          %v392 = vld [vmem:[#allocation4 + $0x8] sm:$0xff]
          %v393 = vsub.f32 %v389, %v391
          %v394 = vsub.f32 %v390, %v392
          %396 = vset.pattern.permute.xlu0 0
          %397 = vperm.xlu0 %396, %v393
          %v398 = vpop.permute.xlu0 %397
          %401 = vset.pattern.permute.xlu0 0
          %402 = vperm.xlu0 %401, %v394
          %v403 = vpop.permute.xlu0 %402
          %405 = vst [vmem:[%s213] sm:$0xff] %v398
          %406 = vst [vmem:[%s213 + $0x8] sm:$0xff] %v403
        $region48: #{tpu_custom_call.1} parent=27 // pred_fallthru
          _
        %s407 = sand.u32 %s94, 1
        %s408 = scalar_lea.sflag [#allocation7], %s407
        %s409 = sand.u32 %s94, 1
        %s410 = smul.addr %s409, 16
        %s411 = scalar_lea.vmem [#allocation10], %s410
        // Predicated region
        $region49: #{tpu_custom_call.1} parent=27 // pred_check
          %p412 = pneg %p104
        $region50: #{tpu_custom_call.1} parent=27 // pred_check_branch
          %414 = sbr.rel (%p412) target = $region52
        $region51: #{tpu_custom_call.1} parent=27 // pred_region
          %s415 = smul.u32 2, %s26
          %s417 = ssub.s32 256, 256
          %418 = vsyncadd %s408, %s417
          %s419 = smul.addr %s415, 128
          %s420 = scalar_lea.hbm %s2, %s419
          %s421 = sshll.u32 %s411, 4
          %s422 = int_to_ptr.vmem [resolvable:$true] %s421
          %427 = dma.vmem_to_hbm [thread:$0]  %s422, 256, %s420, %s408, 128, 128, 8
        $region52: #{tpu_custom_call.1} parent=27 // pred_fallthru
          _
      $region28: #{tpu_custom_call.1} parent=5 // pred_fallthru
        _
      %p428 = scmp.le.s32.totalorder 2, %s17
      // Predicated region
      $region53: #{tpu_custom_call.1} parent=5 // pred_check
        %p429 = pneg %p428
      $region54: #{tpu_custom_call.1} parent=5 // pred_check_branch
        %431 = sbr.rel (%p429) target = $region56
      $region55: #{tpu_custom_call.1} parent=5 // pred_region
        %s432 = ssub.s32 %s17, 2
        // Predicated region
        $region57: #{tpu_custom_call.1} parent=55 // pred_check
          %p433 = pneg %p110
        $region58: #{tpu_custom_call.1} parent=55 // pred_check_branch
          %435 = sbr.rel (%p433) target = $region60
        $region59: #{tpu_custom_call.1} parent=55 // pred_region
          %s436 = sand.u32 %s95, 1
          %s437 = scalar_lea.sflag [#allocation7], %s436
          %s438 = sand.u32 %s95, 1
          %s439 = smul.addr %s438, 16
          %s440 = scalar_lea.vmem [#allocation10], %s439
          %441 = dma.done %s437, 256
        $region60: #{tpu_custom_call.1} parent=55 // pred_fallthru
          _
      $region56: #{tpu_custom_call.1} parent=5 // pred_fallthru
        _
    $region6: #{tpu_custom_call.1} parent=1 // loop_footer
      %s21 = sadd.s32 1, %s17
    $region7: #{tpu_custom_call.1} parent=1 // loop_footer_branch
      %16 = sbr.rel target = $region3
    $region8: #{tpu_custom_call.1} parent=1 // loop_exit
      _
    %442 = vsyncpa [#allocation6], 1
    %s443 = scalar_lea.sflag [#allocation6], 1
    %444 = vsyncpa %s443, 1
    %445 = vsyncpa [#allocation9], 1
    %s446 = scalar_lea.sflag [#allocation9], 1
    %447 = vsyncpa %s446, 1
    %448 = vsyncpa [#allocation7], 1
    %s449 = scalar_lea.sflag [#allocation7], 1
    %450 = vsyncpa %s449, 1

</llo_original>
